<compile_context>
chip_gen: v7x
topology: tpu7x:2x2x1
jax: 0.10.0
libtpu: 0.0.40
codegen_flags: <defaults>
</compile_context>

<pallas_src>
import numpy as np
import jax
import jax.numpy as jnp
from jax.experimental import pallas as pl
from jax.experimental.pallas import tpu as pltpu

N, H, W = 2, 6, 6                 # batch, input spatial
C1, C2 = 6, 16                    # conv1 / conv2 output channels
K = 3                             # conv kernel size
H1, W1 = H - K + 1, W - K + 1     # 4, 4 after conv1
H2, W2 = H1 - K + 1, W1 - K + 1   # 2, 2 after conv2 (maxpool 2x2 -> 1x1)
P1 = N * H1 * W1                  # 32 rows in conv1 im2col
P2 = N * H2 * W2                  # 8  rows in conv2 im2col
T1 = K * K                        # 9  taps (cin = 1) for conv1
T2 = K * K * C1                   # 54 taps*cin for conv2


def net2_kernel(p1_ref, w1_ref, w2_ref, wfc_ref, bias_ref, o_ref):
    # p1_ref  : (P1, T1) f32  conv1 im2col patches, rows = (n, i, j) row-major,
    #                         cols = (di, dj) row-major
    # w1_ref  : (T1, C1) f32  conv1 weights flattened (di, dj) row-major
    # w2_ref  : (T2, C2) f32  conv2 weights flattened (di, dj, ci) row-major
    # wfc_ref : (1, C2)  f32  fc weight row (PyTorch layout (out=1, in=16))
    # bias_ref: (3, C2)  f32  row0 = b1 (zero-padded), row1 = b2, row2[0] = bfc
    # o_ref   : (N, 1)   f32
    b1 = bias_ref[0:1, :C1]                        # (1, C1)
    b2 = bias_ref[1:2, :]                          # (1, C2)
    bfc = bias_ref[2:3, 0:1]                       # (1, 1)

    # ---- conv1: single im2col matmul on the MXU, fused bias + ReLU ----
    h1 = jnp.dot(p1_ref[...], w1_ref[...],
                 preferred_element_type=jnp.float32)          # (32, 6)
    h1 = jnp.maximum(h1 + b1, 0.0)

    # ---- conv2: build im2col from 9 static slices, one (8,54)@(54,16) ----
    h1_4d = h1.reshape(N, H1, W1, C1)
    cols = [h1_4d[:, di:di + H2, dj:dj + W2, :].reshape(P2, C1)
            for di in range(K) for dj in range(K)]            # 9 x (8, 6)
    p2 = jnp.concatenate(cols, axis=1)                        # (8, 54)
    h2 = jnp.dot(p2, w2_ref[...],
                 preferred_element_type=jnp.float32)          # (8, 16)
    h2 = jnp.maximum(h2 + b2, 0.0)

    # ---- maxpool 2x2 over the full 2x2 spatial extent -> (N, C2) ----
    pooled = jnp.max(h2.reshape(N, H2 * W2, C2), axis=1)      # (2, 16)

    # ---- fc (16 -> 1): VPU multiply + lane reduce (MXU pass would be waste) ----
    out = jnp.sum(pooled * wfc_ref[...], axis=-1, keepdims=True) + bfc
    o_ref[...] = out                                          # (N, 1)


def net2_forward(x_nchw, params):
    w1, b1, w2, b2, wfc, bfc = params
    x = x_nchw[:, 0, :, :]                                    # (N, H, W)

    # ----- host-side layout plumbing (zero FLOPs; free outside the kernel) ----
    # conv1 im2col: rows = (n, i, j) row-major, cols = (di, dj) row-major.
    p1 = jnp.concatenate(
        [x[:, di:di + H1, dj:dj + W1].reshape(P1, 1)
         for di in range(K) for dj in range(K)], axis=1)      # (32, 9)
    w1_2d = w1.reshape(T1, C1)                                # (9, 6)
    w2_2d = w2.reshape(T2, C2)                                # (54, 16)
    biases = jnp.zeros((3, C2), jnp.float32)
    biases = biases.at[0, :C1].set(b1[0])
    biases = biases.at[1, :].set(b2[0])
    biases = biases.at[2, 0].set(bfc[0, 0])                   # (3, 16)

    vmem = pltpu.MemorySpace.VMEM
    # Grid-less: the whole problem (<10 KB) lives in VMEM.  At realistic batch
    # sizes, add a grid over N (tiles of >=8 rows, dimension_semantics=
    # ("parallel",)) so v7x's two TensorCores can share the work.
    return pl.pallas_call(
        net2_kernel,
        out_shape=jax.ShapeDtypeStruct((N, 1), jnp.float32),
        in_specs=[pl.BlockSpec(memory_space=vmem)] * 5,
        out_specs=pl.BlockSpec(memory_space=vmem),
    )(p1, w1_2d, w2_2d, wfc, biases)


def make_params(key):
    ks = jax.random.split(key, 6)
    w1 = 0.1 * jax.random.normal(ks[0], (K, K, C1), jnp.float32)       # (kh,kw,cout)
    b1 = 0.1 * jax.random.normal(ks[1], (1, C1), jnp.float32)
    w2 = 0.1 * jax.random.normal(ks[2], (K, K, C1, C2), jnp.float32)   # (kh,kw,cin,cout)
    b2 = 0.1 * jax.random.normal(ks[3], (1, C2), jnp.float32)
    wfc = 0.1 * jax.random.normal(ks[4], (1, C2), jnp.float32)         # (out=1, in=16)
    bfc = 0.1 * jax.random.normal(ks[5], (1, 1), jnp.float32)
    return (w1, b1, w2, b2, wfc, bfc)


def reference_numpy(x_nchw, params):
    """Pure-numpy replica of the PyTorch forward (NCHW semantics)."""
    w1, b1, w2, b2, wfc, bfc = [np.asarray(p, np.float32) for p in params]
    x = np.asarray(x_nchw, np.float32)[:, 0]                  # (N, H, W)
    b1v, b2v, bfcv = b1[0], b2[0], bfc[0, 0]

    h1 = np.zeros((N, H1, W1, C1), np.float32)
    for n in range(N):
        for i in range(H1):
            for j in range(W1):
                for co in range(C1):
                    s = b1v[co]
                    for di in range(K):
                        for dj in range(K):
                            s += x[n, i + di, j + dj] * w1[di, dj, co]
                    h1[n, i, j, co] = max(s, 0.0)

    h2 = np.zeros((N, H2, W2, C2), np.float32)
    for n in range(N):
        for i in range(H2):
            for j in range(W2):
                for co in range(C2):
                    s = b2v[co]
                    for di in range(K):
                        for dj in range(K):
                            for ci in range(C1):
                                s += h1[n, i + di, j + dj, ci] * w2[di, dj, ci, co]
                    h2[n, i, j, co] = max(s, 0.0)

    pooled = h2.max(axis=(1, 2))                              # (N, C2)
    return pooled @ wfc.T + bfcv                              # (N, 1)


if __name__ == "__main__":
    key = jax.random.PRNGKey(0)
    k_x, k_p = jax.random.split(key)
    x = jax.random.normal(k_x, (N, 1, H, W), jnp.float32)     # NCHW like PyTorch
    params = make_params(k_p)

    out = jax.jit(net2_forward)(x, params)
    out = jax.block_until_ready(out)

    ref = reference_numpy(x, params)
    np.testing.assert_allclose(np.asarray(out), ref, rtol=1e-3, atol=1e-3)
    print("KERNEL_OK")
</pallas_src>

<mosaic_0001>
module attributes {stable_mosaic.version = 11 : i64} {
  func.func @net2_kernel(%arg0: memref<32x9xf32, #tpu.memory_space<vmem>>, %arg1: memref<9x6xf32, #tpu.memory_space<vmem>>, %arg2: memref<54x16xf32, #tpu.memory_space<vmem>>, %arg3: memref<1x16xf32, #tpu.memory_space<vmem>>, %arg4: memref<3x16xf32, #tpu.memory_space<vmem>>, %arg5: memref<2x1xf32, #tpu.memory_space<vmem>>) attributes {dimension_semantics = [], scalar_prefetch = 0 : i64, scratch_operands = 0 : i64, tpu.core_type = #tpu.core_type<tc>} {
    %c0 = arith.constant 0 : index
    %c0_0 = arith.constant 0 : index
    %0 = vector.load %arg4[%c0, %c0_0] : memref<3x16xf32, #tpu.memory_space<vmem>>, vector<1x6xf32>
    %c1 = arith.constant 1 : index
    %c0_1 = arith.constant 0 : index
    %1 = vector.load %arg4[%c1, %c0_1] : memref<3x16xf32, #tpu.memory_space<vmem>>, vector<1x16xf32>
    %c2 = arith.constant 2 : index
    %c0_2 = arith.constant 0 : index
    %2 = vector.load %arg4[%c2, %c0_2] : memref<3x16xf32, #tpu.memory_space<vmem>>, vector<1x1xf32>
    %c0_3 = arith.constant 0 : index
    %c0_4 = arith.constant 0 : index
    %3 = vector.load %arg0[%c0_3, %c0_4] : memref<32x9xf32, #tpu.memory_space<vmem>>, vector<32x9xf32>
    %c0_5 = arith.constant 0 : index
    %c0_6 = arith.constant 0 : index
    %4 = vector.load %arg1[%c0_5, %c0_6] : memref<9x6xf32, #tpu.memory_space<vmem>>, vector<9x6xf32>
    %cst = arith.constant dense<0.000000e+00> : vector<32x6xf32>
    %5 = tpu.matmul %3, %4, %cst {dimension_numbers = #tpu.dot_dimension_numbers<[1], [0], [0], [1], [0, 0, 1, 1], [], []>} : vector<32x9xf32>, vector<9x6xf32>, vector<32x6xf32> -> vector<32x6xf32>
    %6 = vector.broadcast %0 : vector<1x6xf32> to vector<32x6xf32>
    %7 = arith.addf %5, %6 : vector<32x6xf32>
    %cst_7 = arith.constant 0.000000e+00 : f32
    %8 = vector.broadcast %cst_7 : f32 to vector<32x6xf32>
    %9 = arith.maximumf %7, %8 : vector<32x6xf32>
    %10 = vector.shape_cast %9 : vector<32x6xf32> to vector<2x4x4x6xf32>
    %11 = vector.extract_strided_slice %10 {offsets = [0, 0, 0, 0], sizes = [2, 2, 2, 6], strides = [1, 1, 1, 1]} : vector<2x4x4x6xf32> to vector<2x2x2x6xf32>
    %12 = vector.shape_cast %11 : vector<2x2x2x6xf32> to vector<8x6xf32>
    %13 = vector.extract_strided_slice %10 {offsets = [0, 0, 1, 0], sizes = [2, 2, 2, 6], strides = [1, 1, 1, 1]} : vector<2x4x4x6xf32> to vector<2x2x2x6xf32>
    %14 = vector.shape_cast %13 : vector<2x2x2x6xf32> to vector<8x6xf32>
    %15 = vector.extract_strided_slice %10 {offsets = [0, 0, 2, 0], sizes = [2, 2, 2, 6], strides = [1, 1, 1, 1]} : vector<2x4x4x6xf32> to vector<2x2x2x6xf32>
    %16 = vector.shape_cast %15 : vector<2x2x2x6xf32> to vector<8x6xf32>
    %17 = vector.extract_strided_slice %10 {offsets = [0, 1, 0, 0], sizes = [2, 2, 2, 6], strides = [1, 1, 1, 1]} : vector<2x4x4x6xf32> to vector<2x2x2x6xf32>
    %18 = vector.shape_cast %17 : vector<2x2x2x6xf32> to vector<8x6xf32>
    %19 = vector.extract_strided_slice %10 {offsets = [0, 1, 1, 0], sizes = [2, 2, 2, 6], strides = [1, 1, 1, 1]} : vector<2x4x4x6xf32> to vector<2x2x2x6xf32>
    %20 = vector.shape_cast %19 : vector<2x2x2x6xf32> to vector<8x6xf32>
    %21 = vector.extract_strided_slice %10 {offsets = [0, 1, 2, 0], sizes = [2, 2, 2, 6], strides = [1, 1, 1, 1]} : vector<2x4x4x6xf32> to vector<2x2x2x6xf32>
    %22 = vector.shape_cast %21 : vector<2x2x2x6xf32> to vector<8x6xf32>
    %23 = vector.extract_strided_slice %10 {offsets = [0, 2, 0, 0], sizes = [2, 2, 2, 6], strides = [1, 1, 1, 1]} : vector<2x4x4x6xf32> to vector<2x2x2x6xf32>
    %24 = vector.shape_cast %23 : vector<2x2x2x6xf32> to vector<8x6xf32>
    %25 = vector.extract_strided_slice %10 {offsets = [0, 2, 1, 0], sizes = [2, 2, 2, 6], strides = [1, 1, 1, 1]} : vector<2x4x4x6xf32> to vector<2x2x2x6xf32>
    %26 = vector.shape_cast %25 : vector<2x2x2x6xf32> to vector<8x6xf32>
    %27 = vector.extract_strided_slice %10 {offsets = [0, 2, 2, 0], sizes = [2, 2, 2, 6], strides = [1, 1, 1, 1]} : vector<2x4x4x6xf32> to vector<2x2x2x6xf32>
    %28 = vector.shape_cast %27 : vector<2x2x2x6xf32> to vector<8x6xf32>
    %29 = tpu.concatenate %12, %14, %16, %18, %20, %22, %24, %26, %28 in 1 : vector<8x6xf32>, vector<8x6xf32>, vector<8x6xf32>, vector<8x6xf32>, vector<8x6xf32>, vector<8x6xf32>, vector<8x6xf32>, vector<8x6xf32>, vector<8x6xf32> -> vector<8x54xf32>
    %c0_8 = arith.constant 0 : index
    %c0_9 = arith.constant 0 : index
    %30 = vector.load %arg2[%c0_8, %c0_9] : memref<54x16xf32, #tpu.memory_space<vmem>>, vector<54x16xf32>
    %cst_10 = arith.constant dense<0.000000e+00> : vector<8x16xf32>
    %31 = tpu.matmul %29, %30, %cst_10 {dimension_numbers = #tpu.dot_dimension_numbers<[1], [0], [0], [1], [0, 0, 1, 1], [], []>} : vector<8x54xf32>, vector<54x16xf32>, vector<8x16xf32> -> vector<8x16xf32>
    %32 = vector.broadcast %1 : vector<1x16xf32> to vector<8x16xf32>
    %33 = arith.addf %31, %32 : vector<8x16xf32>
    %cst_11 = arith.constant 0.000000e+00 : f32
    %34 = vector.broadcast %cst_11 : f32 to vector<8x16xf32>
    %35 = arith.maximumf %33, %34 : vector<8x16xf32>
    %36 = vector.shape_cast %35 : vector<8x16xf32> to vector<2x4x16xf32>
    %cst_12 = arith.constant dense<0xFF800000> : vector<2x16xf32>
    %37 = vector.multi_reduction <maximumf>, %36, %cst_12 [1] : vector<2x4x16xf32> to vector<2x16xf32>
    %c0_13 = arith.constant 0 : index
    %c0_14 = arith.constant 0 : index
    %38 = vector.load %arg3[%c0_13, %c0_14] : memref<1x16xf32, #tpu.memory_space<vmem>>, vector<1x16xf32>
    %39 = vector.broadcast %38 : vector<1x16xf32> to vector<2x16xf32>
    %40 = arith.mulf %37, %39 : vector<2x16xf32>
    %cst_15 = arith.constant dense<0.000000e+00> : vector<2xf32>
    %41 = vector.multi_reduction <add>, %40, %cst_15 [1] : vector<2x16xf32> to vector<2xf32>
    %42 = vector.shape_cast %41 : vector<2xf32> to vector<2x1xf32>
    %43 = vector.broadcast %2 : vector<1x1xf32> to vector<2x1xf32>
    %44 = arith.addf %42, %43 : vector<2x1xf32>
    %c0_16 = arith.constant 0 : index
    %c0_17 = arith.constant 0 : index
    %45 = vector.load %arg5[%c0_16, %c0_17] : memref<2x1xf32, #tpu.memory_space<vmem>>, vector<2x1xf32>
    tpu.vector_store %arg5[%c0_16, %c0_17], %44 {strides = array<i32>} : memref<2x1xf32, #tpu.memory_space<vmem>>, vector<2x1xf32>,
    return
  }
}

</mosaic_0001>

<llo_original>
// kernel: net2_forward.1
$region0: #{net2_forward.1}
  #allocation0 [shape = 'u32[]', space=smem, size = 0x4, offset = 0x4, fixed_abs, tag = 'smem constant byte address 0x4 - core index']
  #allocation1 [shape = 'u32[144,128]{1,0:T(1,128)}', space=vmem, size = 0x12000, scoped, tag = 'internal scratch']
  %s0 = inlined_call_operand.vmem [shape: f32[32,9], index: 0, kind: input, shape index: {}]
  %s1 = inlined_call_operand.vmem [shape: f32[9,6], index: 1, kind: input, shape index: {}]
  %s2 = inlined_call_operand.vmem [shape: f32[54,16], index: 2, kind: input, shape index: {}]
  %s3 = inlined_call_operand.vmem [shape: f32[1,16], index: 3, kind: input, shape index: {}]
  %s4 = inlined_call_operand.vmem [shape: f32[3,16], index: 4, kind: input, shape index: {}]
  %s5 = inlined_call_operand.vmem [shape: f32[2,1], index: 5, kind: output, shape index: {}]
  %s6 = sld [smem:[#allocation0]]
  $region30: #{net2_forward.1} parent=0
    _
  %s8 = ssub.s32 1, %s6
  %s9 = scalar_select 0, %s8, %s6
  // Predicated region
  $region2: #{net2_forward.1} parent=0 // pred_check
    _
  $region3: #{net2_forward.1} parent=0 // pred_check_branch
    %11 = sbr.rel (0) target = $region5
  $region4: #{net2_forward.1} parent=0 // pred_region
    _
  $region5: #{net2_forward.1} parent=0 // pred_fallthru
    _
  // Predicated region
  $region6: #{net2_forward.1} parent=0 // pred_check
    _
  $region7: #{net2_forward.1} parent=0 // pred_check_branch
    %13 = sbr.rel (0) target = $region9
  $region8: #{net2_forward.1} parent=0 // pred_region
    _
  $region9: #{net2_forward.1} parent=0 // pred_fallthru
    _
  // Predicated region
  $region10: #{net2_forward.1} parent=0 // pred_check
    _
  $region11: #{net2_forward.1} parent=0 // pred_check_branch
    %15 = sbr.rel (0) target = $region13
  $region12: #{net2_forward.1} parent=0 // pred_region
    _
  $region13: #{net2_forward.1} parent=0 // pred_fallthru
    _
  // Predicated region
  $region14: #{net2_forward.1} parent=0 // pred_check
    _
  $region15: #{net2_forward.1} parent=0 // pred_check_branch
    %17 = sbr.rel (0) target = $region17
  $region16: #{net2_forward.1} parent=0 // pred_region
    _
  $region17: #{net2_forward.1} parent=0 // pred_fallthru
    _
  // Predicated region
  $region18: #{net2_forward.1} parent=0 // pred_check
    _
  $region19: #{net2_forward.1} parent=0 // pred_check_branch
    %19 = sbr.rel (0) target = $region21
  $region20: #{net2_forward.1} parent=0 // pred_region
    _
  $region21: #{net2_forward.1} parent=0 // pred_fallthru
    _
  %v20 = vld [vmem:[%s4] sm:$0x1]
  %v21 = vld [vmem:[%s4 + $0x1] sm:$0x1]
  %v22 = vld [vmem:[%s4 + $0x2] sm:$0x1]
  %v23 = vld [vmem:[%s0] sm:$0xff]
  %v24 = vld [vmem:[%s0 + $0x8] sm:$0xff]
  %v25 = vld [vmem:[%s0 + $0x10] sm:$0xff]
  %v26 = vld [vmem:[%s0 + $0x18] sm:$0xff]
  %v27 = vld [vmem:[%s1] sm:$0xff]
  %v28 = vld [vmem:[%s1 + $0x8] sm:$0x1]
  %v29 = vlaneseq
  %v30 = vshrl.u32 %v29, 7
  %v31 = vsub.s32 0, %v30
  %v32 = vrot.slane %v20, %v31
  %vm33 = vcmask 72704
  %v35 = vsel %vm33, %v23, 0
  %v38 = vsel %vm33, %v24, 0
  %v41 = vsel %vm33, %v25, 0
  %v44 = vsel %vm33, %v26, 0
  %vm46 = vcmask 1040384
  %v48 = vsel %vm46, %v28, 0
  %50 = vmatprep.subr.mxu0 0.0
  %51 = vmatpush1.msra.mxu0 %v27
  %52 = vmatprep.subr.mxu0 0.0
  %53 = vmatpush1.msra.mxu0 %v48
  %54 = vmatprep.subr.mxu0 0.0
  %55 = vmatpush1.msra.mxu0 0.0
  %56 = vmatprep.subr.mxu0 0.0
  %57 = vmatpush1.msra.mxu0 0.0
  %58 = vmatprep.subr.mxu0 0.0
  %59 = vmatpush1.msra.mxu0 0.0
  %60 = vmatprep.subr.mxu0 0.0
  %61 = vmatpush1.msra.mxu0 0.0
  %62 = vmatprep.subr.mxu0 0.0
  %63 = vmatpush1.msra.mxu0 0.0
  %64 = vmatprep.subr.mxu0 0.0
  %65 = vmatpush1.msra.mxu0 0.0
  %66 = vmatprep.subr.mxu0 0.0
  %67 = vmatpush1.msra.mxu0 0.0
  %68 = vmatprep.subr.mxu0 0.0
  %69 = vmatpush1.msra.mxu0 0.0
  %70 = vmatprep.subr.mxu0 0.0
  %71 = vmatpush1.msra.mxu0 0.0
  %72 = vmatprep.subr.mxu0 0.0
  %73 = vmatpush1.msra.mxu0 0.0
  %74 = vmatprep.subr.mxu0 0.0
  %75 = vmatpush1.msra.mxu0 0.0
  %76 = vmatprep.subr.mxu0 0.0
  %77 = vmatpush1.msra.mxu0 0.0
  %78 = vmatprep.subr.mxu0 0.0
  %79 = vmatpush1.msra.mxu0 0.0
  %80 = vmatprep.subr.mxu0 0.0
  %81 = vmatpush1.msra.mxu0 0.0
  %82 = vmatprep.subr.mxu0 0.0
  %83 = vmatpush1.msra.mxu0 0.0
  %84 = vmatprep.subr.mxu0 0.0
  %85 = vmatpush1.msra.mxu0 0.0
  %86 = vmatprep.subr.mxu0 0.0
  %87 = vmatpush1.msra.mxu0 0.0
  %88 = vmatprep.subr.mxu0 0.0
  %89 = vmatpush1.msra.mxu0 0.0
  %90 = vmatprep.subr.mxu0 0.0
  %91 = vmatpush1.msra.mxu0 0.0
  %92 = vmatprep.subr.mxu0 0.0
  %93 = vmatpush1.msra.mxu0 0.0
  %94 = vmatprep.subr.mxu0 0.0
  %95 = vmatpush1.msra.mxu0 0.0
  %96 = vmatprep.subr.mxu0 0.0
  %97 = vmatpush1.msra.mxu0 0.0
  %98 = vmatprep.subr.mxu0 0.0
  %99 = vmatpush1.msra.mxu0 0.0
  %100 = vmatprep.subr.mxu0 0.0
  %101 = vmatpush1.msra.mxu0 0.0
  %102 = vmatprep.subr.mxu0 0.0
  %103 = vmatpush1.msra.mxu0 0.0
  %104 = vmatprep.subr.mxu0 0.0
  %105 = vmatpush1.msra.mxu0 0.0
  %106 = vmatprep.subr.mxu0 0.0
  %107 = vmatpush1.msra.mxu0 0.0
  %108 = vmatprep.subr.mxu0 0.0
  %109 = vmatpush1.msra.mxu0 0.0
  %110 = vmatprep.subr.mxu0 0.0
  %111 = vmatpush1.msra.mxu0 0.0
  %112 = vmatprep.subr.mxu0 0.0
  %113 = vmatpush1.msra.mxu0 0.0
  %114 = vmatprep.mubr.f32.mxu0 0.0
  %115 = vmatmul.mubr.f32.gmra.mrb[0].mxu0 %v35
  %v116 = vpop.f32.mrb[0].mxu0
  %v117 = vadd.f32 %v32, %v116
  %v118 = vpop.f32.mrb[0].mxu0
  %119 = vmatprep.mubr.f32.mxu0 0.0
  %120 = vmatmul.mubr.f32.gmra.mrb[0].mxu0 %v38
  %v121 = vpop.f32.mrb[0].mxu0
  %v122 = vadd.f32 %v32, %v121
  %v123 = vpop.f32.mrb[0].mxu0
  %124 = vmatprep.mubr.f32.mxu0 0.0
  %125 = vmatmul.mubr.f32.gmra.mrb[0].mxu0 %v41
  %v126 = vpop.f32.mrb[0].mxu0
  %v127 = vadd.f32 %v32, %v126
  %v128 = vpop.f32.mrb[0].mxu0
  %129 = vmatprep.mubr.f32.mxu0 0.0
  %130 = vmatmul.mubr.f32.gmra.mrb[0].mxu0 %v44
  %v131 = vpop.f32.mrb[0].mxu0
  %v132 = vadd.f32 %v32, %v131
  %v133 = vpop.f32.mrb[0].mxu0
  %134 = vdwg.mxu0
  %v135 = vmax.f32 %v117, 0.0
  %v136 = vmax.f32 %v122, 0.0
  %v137 = vmax.f32 %v127, 0.0
  %v138 = vmax.f32 %v132, 0.0
  %v143 = vcombine.high %v135, %v135
  %v144 = vcombine.high %v136, %v136
  %v145 = vcombine.high %v137, %v137
  %v146 = vcombine.high %v138, %v138
  %v148 = vunpack.c.l.s4 1983009808
  %v149 = vunpack.c.0.s8 %v148
  %v150 = vlaneseq
  %v151 = vshrl.u32 %v150, 7
  %v152 = vsub.s32 %v149, %v151
  %v153 = vrot.slane %v135, %v152
  %v154 = vcombine.high %v153, %v153
  %v156 = vunpack.c.l.s4 1983009808
  %v157 = vunpack.c.0.s8 %v156
  %v158 = vlaneseq
  %v159 = vshrl.u32 %v158, 7
  %v160 = vsub.s32 %v157, %v159
  %v161 = vrot.slane %v143, %v160
  %v162 = vcombine.high %v161, %v161
  %v164 = vunpack.c.l.s4 1983009808
  %v165 = vunpack.c.0.s8 %v164
  %v166 = vlaneseq
  %v167 = vshrl.u32 %v166, 7
  %v168 = vsub.s32 %v165, %v167
  %v169 = vrot.slane %v137, %v168
  %v170 = vcombine.high %v169, %v169
  %v172 = vunpack.c.l.s4 1983009808
  %v173 = vunpack.c.0.s8 %v172
  %v174 = vlaneseq
  %v175 = vshrl.u32 %v174, 7
  %v176 = vsub.s32 %v173, %v175
  %v177 = vrot.slane %v145, %v176
  %v178 = vcombine.high %v177, %v177
  %vm179 = vcmask 1042434
  %vm180 = vmor %vm46, %vm179
  %vm181 = vcmask 1044484
  %vm182 = vmor %vm180, %vm181
  %vm183 = vcmask 1046534
  %vm184 = vmor %vm182, %vm183
  %v185 = vrot.slane %v153, 7
  %v186 = vrot.slane %v185, 2
  %v187 = vrot.slane %v154, 7
  %v188 = vsel %vm184, %v186, %v187
  %v189 = vrot.slane %v161, 7
  %v190 = vrot.slane %v189, 2
  %v191 = vrot.slane %v162, 7
  %v192 = vsel %vm184, %v190, %v191
  %v193 = vrot.slane %v169, 7
  %v194 = vrot.slane %v193, 2
  %v195 = vrot.slane %v170, 7
  %v196 = vsel %vm184, %v194, %v195
  %v197 = vrot.slane %v177, 7
  %v198 = vrot.slane %v197, 2
  %v199 = vrot.slane %v178, 7
  %v200 = vsel %vm184, %v198, %v199
  %v202 = vunpack.c.l.s4 1983009808
  %v203 = vunpack.c.0.s8 %v202
  %v204 = vlaneseq
  %v205 = vshrl.u32 %v204, 7
  %v206 = vsub.s32 %v203, %v205
  %v207 = vrot.slane %v136, %v206
  %v208 = vcombine.high %v207, %v207
  %v210 = vunpack.c.l.s4 1983009808
  %v211 = vunpack.c.0.s8 %v210
  %v212 = vlaneseq
  %v213 = vshrl.u32 %v212, 7
  %v214 = vsub.s32 %v211, %v213
  %v215 = vrot.slane %v138, %v214
  %v216 = vcombine.high %v215, %v215
  %v217 = vrot.slane %v207, 7
  %v218 = vrot.slane %v217, 2
  %v219 = vrot.slane %v208, 7
  %v220 = vsel %vm184, %v218, %v219
  %v221 = vrot.slane %v215, 7
  %v222 = vrot.slane %v221, 2
  %v223 = vrot.slane %v216, 7
  %v224 = vsel %vm184, %v222, %v223
  %v226 = vunpack.c.l.s4 1983009808
  %v227 = vunpack.c.0.s8 %v226
  %v228 = vlaneseq
  %v229 = vshrl.u32 %v228, 7
  %v230 = vsub.s32 %v227, %v229
  %v231 = vrot.slane %v144, %v230
  %v232 = vcombine.high %v231, %v231
  %v234 = vunpack.c.l.s4 1983009808
  %v235 = vunpack.c.0.s8 %v234
  %v236 = vlaneseq
  %v237 = vshrl.u32 %v236, 7
  %v238 = vsub.s32 %v235, %v237
  %v239 = vrot.slane %v146, %v238
  %v240 = vcombine.high %v239, %v239
  %v241 = vrot.slane %v231, 7
  %v242 = vrot.slane %v241, 2
  %v243 = vrot.slane %v232, 7
  %v244 = vsel %vm184, %v242, %v243
  %v245 = vrot.slane %v239, 7
  %v246 = vrot.slane %v245, 2
  %v247 = vrot.slane %v240, 7
  %v248 = vsel %vm184, %v246, %v247
  %v249 = vcombine.low %v135, %v143
  %v250 = vcombine.low %v137, %v145
  %v252 = vunpack.c.l.s4 1983009808
  %v253 = vunpack.c.0.s8 %v252
  %v254 = vlaneseq
  %v255 = vshrl.u32 %v254, 7
  %v256 = vsub.s32 %v253, %v255
  %v257 = vrot.slane %v249, %v256
  %v259 = vunpack.c.l.s4 1983009808
  %v260 = vunpack.c.0.s8 %v259
  %v261 = vlaneseq
  %v262 = vshrl.u32 %v261, 7
  %v263 = vsub.s32 %v260, %v262
  %v264 = vrot.slane %v250, %v263
  %v265 = vcombine.low %v257, %v264
  %v267 = vcombine.low %v188, %v192
  %v268 = vcombine.low %v196, %v200
  %v270 = vunpack.c.l.s4 1983009808
  %v271 = vunpack.c.0.s8 %v270
  %v272 = vlaneseq
  %v273 = vshrl.u32 %v272, 7
  %v274 = vsub.s32 %v271, %v273
  %v275 = vrot.slane %v267, %v274
  %v277 = vunpack.c.l.s4 1983009808
  %v278 = vunpack.c.0.s8 %v277
  %v279 = vlaneseq
  %v280 = vshrl.u32 %v279, 7
  %v281 = vsub.s32 %v278, %v280
  %v282 = vrot.slane %v268, %v281
  %v283 = vcombine.low %v275, %v282
  %284 = vrot.lane.b32.xlu0 %v283, 6
  %v285 = vpop.permute.xlu0 %284
  %v287 = vcombine.low %v154, %v162
  %v288 = vcombine.low %v170, %v178
  %v290 = vunpack.c.l.s4 1983009808
  %v291 = vunpack.c.0.s8 %v290
  %v292 = vlaneseq
  %v293 = vshrl.u32 %v292, 7
  %v294 = vsub.s32 %v291, %v293
  %v295 = vrot.slane %v287, %v294
  %v297 = vunpack.c.l.s4 1983009808
  %v298 = vunpack.c.0.s8 %v297
  %v299 = vlaneseq
  %v300 = vshrl.u32 %v299, 7
  %v301 = vsub.s32 %v298, %v300
  %v302 = vrot.slane %v288, %v301
  %v303 = vcombine.low %v295, %v302
  %304 = vrot.lane.b32.xlu0 %v303, 12
  %v305 = vpop.permute.xlu0 %304
  %v307 = vcombine.low %v143, %v136
  %v308 = vcombine.low %v145, %v138
  %v310 = vunpack.c.l.s4 1983009808
  %v311 = vunpack.c.0.s8 %v310
  %v312 = vlaneseq
  %v313 = vshrl.u32 %v312, 7
  %v314 = vsub.s32 %v311, %v313
  %v315 = vrot.slane %v307, %v314
  %v317 = vunpack.c.l.s4 1983009808
  %v318 = vunpack.c.0.s8 %v317
  %v319 = vlaneseq
  %v320 = vshrl.u32 %v319, 7
  %v321 = vsub.s32 %v318, %v320
  %v322 = vrot.slane %v308, %v321
  %v323 = vcombine.low %v315, %v322
  %324 = vrot.lane.b32.xlu0 %v323, 18
  %v325 = vpop.permute.xlu0 %324
  %v327 = vcombine.low %v192, %v220
  %v328 = vcombine.low %v200, %v224
  %v330 = vunpack.c.l.s4 1983009808
  %v331 = vunpack.c.0.s8 %v330
  %v332 = vlaneseq
  %v333 = vshrl.u32 %v332, 7
  %v334 = vsub.s32 %v331, %v333
  %v335 = vrot.slane %v327, %v334
  %v337 = vunpack.c.l.s4 1983009808
  %v338 = vunpack.c.0.s8 %v337
  %v339 = vlaneseq
  %v340 = vshrl.u32 %v339, 7
  %v341 = vsub.s32 %v338, %v340
  %v342 = vrot.slane %v328, %v341
  %v343 = vcombine.low %v335, %v342
  %344 = vrot.lane.b32.xlu0 %v343, 24
  %v345 = vpop.permute.xlu0 %344
  %v347 = vcombine.low %v162, %v208
  %v348 = vcombine.low %v178, %v216
  %v350 = vunpack.c.l.s4 1983009808
  %v351 = vunpack.c.0.s8 %v350
  %v352 = vlaneseq
  %v353 = vshrl.u32 %v352, 7
  %v354 = vsub.s32 %v351, %v353
  %v355 = vrot.slane %v347, %v354
  %v357 = vunpack.c.l.s4 1983009808
  %v358 = vunpack.c.0.s8 %v357
  %v359 = vlaneseq
  %v360 = vshrl.u32 %v359, 7
  %v361 = vsub.s32 %v358, %v360
  %v362 = vrot.slane %v348, %v361
  %v363 = vcombine.low %v355, %v362
  %364 = vrot.lane.b32.xlu0 %v363, 30
  %v365 = vpop.permute.xlu0 %364
  %v367 = vcombine.low %v136, %v144
  %v368 = vcombine.low %v138, %v146
  %v370 = vunpack.c.l.s4 1983009808
  %v371 = vunpack.c.0.s8 %v370
  %v372 = vlaneseq
  %v373 = vshrl.u32 %v372, 7
  %v374 = vsub.s32 %v371, %v373
  %v375 = vrot.slane %v367, %v374
  %v377 = vunpack.c.l.s4 1983009808
  %v378 = vunpack.c.0.s8 %v377
  %v379 = vlaneseq
  %v380 = vshrl.u32 %v379, 7
  %v381 = vsub.s32 %v378, %v380
  %v382 = vrot.slane %v368, %v381
  %v383 = vcombine.low %v375, %v382
  %384 = vrot.lane.b32.xlu0 %v383, 36
  %v385 = vpop.permute.xlu0 %384
  %v387 = vcombine.low %v220, %v244
  %v388 = vcombine.low %v224, %v248
  %v390 = vunpack.c.l.s4 1983009808
  %v391 = vunpack.c.0.s8 %v390
  %v392 = vlaneseq
  %v393 = vshrl.u32 %v392, 7
  %v394 = vsub.s32 %v391, %v393
  %v395 = vrot.slane %v387, %v394
  %v397 = vunpack.c.l.s4 1983009808
  %v398 = vunpack.c.0.s8 %v397
  %v399 = vlaneseq
  %v400 = vshrl.u32 %v399, 7
  %v401 = vsub.s32 %v398, %v400
  %v402 = vrot.slane %v388, %v401
  %v403 = vcombine.low %v395, %v402
  %404 = vrot.lane.b32.xlu0 %v403, 42
  %v405 = vpop.permute.xlu0 %404
  %v407 = vcombine.low %v208, %v232
  %v408 = vcombine.low %v216, %v240
  %v410 = vunpack.c.l.s4 1983009808
  %v411 = vunpack.c.0.s8 %v410
  %v412 = vlaneseq
  %v413 = vshrl.u32 %v412, 7
  %v414 = vsub.s32 %v411, %v413
  %v415 = vrot.slane %v407, %v414
  %v417 = vunpack.c.l.s4 1983009808
  %v418 = vunpack.c.0.s8 %v417
  %v419 = vlaneseq
  %v420 = vshrl.u32 %v419, 7
  %v421 = vsub.s32 %v418, %v420
  %v422 = vrot.slane %v408, %v421
  %v423 = vcombine.low %v415, %v422
  %424 = vrot.lane.b32.xlu0 %v423, 48
  %v425 = vpop.permute.xlu0 %424
  %vm427 = vcmask 48128
  %v428 = vsel %vm427, %v265, %v285
  %vm429 = vcmask 97280
  %v430 = vsel %vm429, %v428, %v305
  %vm431 = vcmask 146432
  %v432 = vsel %vm431, %v430, %v325
  %vm433 = vcmask 195584
  %v434 = vsel %vm433, %v432, %v345
  %vm435 = vcmask 244736
  %v436 = vsel %vm435, %v434, %v365
  %vm437 = vcmask 293888
  %v438 = vsel %vm437, %v436, %v385
  %vm439 = vcmask 343040
  %v440 = vsel %vm439, %v438, %v405
  %vm441 = vcmask 392192
  %v442 = vsel %vm441, %v440, %v425
  %v443 = vld [vmem:[%s2] sm:$0xff]
  %v444 = vld [vmem:[%s2 + $0x8] sm:$0xff]
  %v445 = vld [vmem:[%s2 + $0x10] sm:$0xff]
  %v446 = vld [vmem:[%s2 + $0x18] sm:$0xff]
  %v447 = vld [vmem:[%s2 + $0x20] sm:$0xff]
  %v448 = vld [vmem:[%s2 + $0x28] sm:$0xff]
  %v449 = vld [vmem:[%s2 + $0x30] sm:$0x3f]
  %v450 = vlaneseq
  %v451 = vshrl.u32 %v450, 7
  %v452 = vsub.s32 0, %v451
  %v453 = vrot.slane %v21, %v452
  %vm454 = vcmask 441344
  %v456 = vsel %vm454, %v442, 0
  %vm458 = vcmask 1045504
  %v460 = vsel %vm458, %v449, 0
  %462 = vmatprep.subr.mxu0 0.0
  %463 = vmatpush1.msra.mxu0 %v443
  %464 = vmatprep.subr.mxu0 0.0
  %465 = vmatpush1.msra.mxu0 %v444
  %466 = vmatprep.subr.mxu0 0.0
  %467 = vmatpush1.msra.mxu0 %v445
  %468 = vmatprep.subr.mxu0 0.0
  %469 = vmatpush1.msra.mxu0 %v446
  %470 = vmatprep.subr.mxu0 0.0
  %471 = vmatpush1.msra.mxu0 %v447
  %472 = vmatprep.subr.mxu0 0.0
  %473 = vmatpush1.msra.mxu0 %v448
  %474 = vmatprep.subr.mxu0 0.0
  %475 = vmatpush1.msra.mxu0 %v460
  %476 = vmatprep.subr.mxu0 0.0
  %477 = vmatpush1.msra.mxu0 0.0
  %478 = vmatprep.subr.mxu0 0.0
  %479 = vmatpush1.msra.mxu0 0.0
  %480 = vmatprep.subr.mxu0 0.0
  %481 = vmatpush1.msra.mxu0 0.0
  %482 = vmatprep.subr.mxu0 0.0
  %483 = vmatpush1.msra.mxu0 0.0
  %484 = vmatprep.subr.mxu0 0.0
  %485 = vmatpush1.msra.mxu0 0.0
  %486 = vmatprep.subr.mxu0 0.0
  %487 = vmatpush1.msra.mxu0 0.0
  %488 = vmatprep.subr.mxu0 0.0
  %489 = vmatpush1.msra.mxu0 0.0
  %490 = vmatprep.subr.mxu0 0.0
  %491 = vmatpush1.msra.mxu0 0.0
  %492 = vmatprep.subr.mxu0 0.0
  %493 = vmatpush1.msra.mxu0 0.0
  %494 = vmatprep.subr.mxu0 0.0
  %495 = vmatpush1.msra.mxu0 0.0
  %496 = vmatprep.subr.mxu0 0.0
  %497 = vmatpush1.msra.mxu0 0.0
  %498 = vmatprep.subr.mxu0 0.0
  %499 = vmatpush1.msra.mxu0 0.0
  %500 = vmatprep.subr.mxu0 0.0
  %501 = vmatpush1.msra.mxu0 0.0
  %502 = vmatprep.subr.mxu0 0.0
  %503 = vmatpush1.msra.mxu0 0.0
  %504 = vmatprep.subr.mxu0 0.0
  %505 = vmatpush1.msra.mxu0 0.0
  %506 = vmatprep.subr.mxu0 0.0
  %507 = vmatpush1.msra.mxu0 0.0
  %508 = vmatprep.subr.mxu0 0.0
  %509 = vmatpush1.msra.mxu0 0.0
  %510 = vmatprep.subr.mxu0 0.0
  %511 = vmatpush1.msra.mxu0 0.0
  %512 = vmatprep.subr.mxu0 0.0
  %513 = vmatpush1.msra.mxu0 0.0
  %514 = vmatprep.subr.mxu0 0.0
  %515 = vmatpush1.msra.mxu0 0.0
  %516 = vmatprep.subr.mxu0 0.0
  %517 = vmatpush1.msra.mxu0 0.0
  %518 = vmatprep.subr.mxu0 0.0
  %519 = vmatpush1.msra.mxu0 0.0
  %520 = vmatprep.subr.mxu0 0.0
  %521 = vmatpush1.msra.mxu0 0.0
  %522 = vmatprep.subr.mxu0 0.0
  %523 = vmatpush1.msra.mxu0 0.0
  %524 = vmatprep.subr.mxu0 0.0
  %525 = vmatpush1.msra.mxu0 0.0
  %526 = vmatprep.mubr.f32.mxu0 0.0
  %527 = vmatmul.mubr.f32.gmra.mrb[0].mxu0 %v456
  %v528 = vpop.f32.mrb[0].mxu0
  %v529 = vadd.f32 %v453, %v528
  %v530 = vpop.f32.mrb[0].mxu0
  %531 = vdwg.mxu0
  %v532 = vmax.f32 %v529, 0.0
  %v534 = vcombine.high %v532, %v532
  %vm536 = vcmask 125952
  %v537 = vsel %vm536, %v532, -inf
  %v538 = vrot.slane %v537, 4
  %v539 = vmax.f32 %v537, %v538
  %v540 = vrot.slane %v539, 2
  %v541 = vmax.f32 %v539, %v540
  %v542 = vrot.slane %v541, 1
  %v543 = vmax.f32 %v541, %v542
  %v544 = vsel %vm536, %v534, -inf
  %v545 = vrot.slane %v544, 4
  %v546 = vmax.f32 %v544, %v545
  %v547 = vrot.slane %v546, 2
  %v548 = vmax.f32 %v546, %v547
  %v549 = vrot.slane %v548, 1
  %v550 = vmax.f32 %v548, %v549
  %v551 = vld [vmem:[%s3] sm:$0x1]
  %v553 = vlaneseq
  %v554 = vshrl.u32 %v553, 7
  %v555 = vsub.s32 0, %v554
  %v556 = vrot.slane %v551, %v555
  %v558 = vmul.f32 %v543, %v556
  %v559 = vmul.f32 %v550, %v556
  %v562 = vrot.slane %v559, 7
  %vm563 = vcmask 1041409
  %v564 = vsel %vm563, %v562, %v558
  %vm566 = vcmask 123904
  %v567 = vsel %vm566, %v564, 0.0
  %568 = vadd.xlane.f32.xlu0 %v567
  %v569 = vpop.xlane.xlu0 %568
  %v570 = vlaneseq
  %v571 = vshrl.u32 %v570, 7
  %v572 = vsub.s32 0, %v571
  %v573 = vrot.slane %v22, %v572
  %v574 = vadd.f32 %v569, %v573
  %vm575 = vcmask 1024
  %576 = vst.msk [vmem:[%s5] sm:$0x3] %vm575, %v574
  // Predicated region
  $region22: #{net2_forward.1} parent=0 // pred_check
    _
  $region23: #{net2_forward.1} parent=0 // pred_check_branch
    %578 = sbr.rel (0) target = $region25
  $region24: #{net2_forward.1} parent=0 // pred_region
    _
  $region25: #{net2_forward.1} parent=0 // pred_fallthru
    _
  // Predicated region
  $region26: #{net2_forward.1} parent=0 // pred_check
    _
  $region27: #{net2_forward.1} parent=0 // pred_check_branch
    %580 = sbr.rel (0) target = $region29
  $region28: #{net2_forward.1} parent=0 // pred_region
    _
  $region29: #{net2_forward.1} parent=0 // pred_fallthru
    _

</llo_original>
